<compile_context>
chip_gen: v7x
topology: tpu7x:2x2x1
jax: 0.10.0
libtpu: 0.0.40
codegen_flags: <defaults>
</compile_context>

<pallas_src>
import functools
import math

import jax
import jax.numpy as jnp
import numpy as np
from jax import lax
from jax.experimental import pallas as pl
from jax.experimental.pallas import tpu as pltpu


def _round_up(x, m):
    return ((x + m - 1) // m) * m


def _bilinear_matrix(out_size: int, in_size: int) -> np.ndarray:
    """Interpolation matrix (out_size, in_size) matching
    nn.Upsample(mode='bilinear', align_corners=False)."""
    scale = in_size / out_size
    A = np.zeros((out_size, in_size), np.float32)
    for d in range(out_size):
        src = (d + 0.5) * scale - 0.5
        src = max(src, 0.0)
        i0 = min(int(np.floor(src)), in_size - 1)
        i1 = min(i0 + 1, in_size - 1)
        w1 = src - i0
        A[d, i0] += 1.0 - w1
        A[d, i1] += w1
    return A


def _const_spec(block_shape, index_map):
    """BlockSpec for operands fetched once (constant index_map): single-buffer
    them (pipeline_mode=pl.Buffered(1)) to save VMEM; fall back gracefully."""
    try:
        return pl.BlockSpec(block_shape, index_map, pipeline_mode=pl.Buffered(1))
    except Exception:  # pragma: no cover - older JAX without pipeline_mode
        return pl.BlockSpec(block_shape, index_map)


# --------------------------- kernels ---------------------------------------


def _conv_im2col_kernel(*refs, ksize, cinp, wpitch, lenp, n_tile, has_bn):
    """In-kernel im2col + one wide conv matmul (+ BN partial stats)."""
    if has_bn:
        x_ref, w_ref, mask_ref, y_ref, psum_ref, pssq_ref, p_ref = refs
    else:
        x_ref, w_ref, y_ref, p_ref = refs

    # Build the patch matrix in VMEM from flat, shifted slices of the padded
    # input rows (row pitch = wpitch).  No K^2 expansion ever touches HBM.
    for n in range(n_tile):
        for kh in range(ksize):
            for kw in range(ksize):
                tap = kh * ksize + kw
                start = kh * wpitch + kw
                p_ref[tap * cinp:(tap + 1) * cinp, n * lenp:(n + 1) * lenp] = (
                    x_ref[n, :, start:start + lenp])

    # (Cout, K*K*Cin_pad) @ (K*K*Cin_pad, n_tile*lenp), bf16 x bf16 -> f32.
    y = jnp.dot(w_ref[...], p_ref[...], preferred_element_type=jnp.float32)

    for n in range(n_tile):
        y_ref[n] = y[:, n * lenp:(n + 1) * lenp].astype(y_ref.dtype)

    if has_bn:
        # Mask out the junk (wo >= Wo) pitch-padding columns before the stats.
        ym = y * mask_ref[...]
        psum_ref[0] = jnp.sum(ym, axis=1, keepdims=True)
        pssq_ref[0] = jnp.sum(ym * ym, axis=1, keepdims=True)


def _affine_up_kernel(*refs, has_relu, has_up, wo, n_tile):
    """y*scale + shift (folded bias or BN) [+ReLU] [+separable bilinear up]."""
    idx = 0
    y_ref = refs[idx]; idx += 1           # (n_tile, Cout, Ho, Wpitch) bf16
    sc_ref = refs[idx]; idx += 1          # (Cout, 1, 1) f32
    sh_ref = refs[idx]; idx += 1          # (Cout, 1, 1) f32
    ah_ref = awt_ref = None
    if has_up:
        ah_ref = refs[idx]; idx += 1      # (up, Ho) bf16
        awt_ref = refs[idx]; idx += 1     # (Wo, up) bf16
    o_ref = refs[idx]

    y = y_ref[...][..., :wo].astype(jnp.float32)        # drop pitch padding
    y = y * sc_ref[...] + sh_ref[...]
    if has_relu:
        y = jnp.maximum(y, 0.0)

    if not has_up:
        o_ref[...] = y.astype(o_ref.dtype)
        return

    cout, ho = y.shape[1], y.shape[2]
    up = ah_ref.shape[0]
    awt_b = jnp.broadcast_to(awt_ref[...], (cout, wo, up))
    ah_b = jnp.broadcast_to(ah_ref[...], (cout, up, ho))
    yb = y.astype(jnp.bfloat16)
    for n in range(n_tile):
        # Separable bilinear resize: contract W then H (2 batched matmuls).
        t = jnp.einsum('chw,cwu->chu', yb[n], awt_b,
                       preferred_element_type=jnp.float32)       # (Cout, Ho, up)
        o = jnp.einsum('cuh,chw->cuw', ah_b, t.astype(jnp.bfloat16),
                       preferred_element_type=jnp.float32)       # (Cout, up, up)
        o_ref[n] = o.astype(o_ref.dtype)


# --------------------------- wrapper ----------------------------------------


def _pick_batch_tile(n, max_tile=8):
    for d in range(min(n, max_tile), 0, -1):
        if n % d == 0:
            return d
    return 1


def basic_conv(x, weight, bias=None, *, stride=1, padding=0, dilation=1,
               groups=1, relu=False, bn=False, bn_gamma=None, bn_beta=None,
               bn_eps=1e-5, up_size=0):
    """Pallas TPU implementation of BasicConv.forward (NCHW, float32 in/out)."""
    if stride != 1 or dilation != 1 or groups != 1:
        # TODO(synk): stride/dilation/groups != 1 not implemented in this kernel.
        raise NotImplementedError("only stride=1, dilation=1, groups=1 supported")

    N, Cin, H, W = x.shape
    Cout, Cin_w, K, K2 = weight.shape
    assert K == K2 and Cin_w == Cin
    if bn:
        assert bn_gamma is not None and bn_beta is not None

    Hp, Wp = H + 2 * padding, W + 2 * padding
    Ho, Wo = Hp - K + 1, Wp - K + 1

    # Row pitch of the flattened conv intermediate.  Prefer a pitch making
    # Ho*Wpitch a multiple of 128 (lane-dense writeback) when that is cheap.
    step = 128 // math.gcd(Ho, 128)
    wpitch = _round_up(Wp, step)
    if wpitch > Wp + 64:
        wpitch = Wp
    lenp = Ho * wpitch

    cinp = _round_up(Cin, 8)
    kkc = K * K * cinp
    lpad = _round_up(Hp * wpitch + K - 1, 128)

    n_tile = _pick_batch_tile(N)
    n_steps = N // n_tile

    f32, bf16 = jnp.float32, jnp.bfloat16

    # ---- operand prep (cheap: pad + flatten, no K^2 expansion) --------------
    xp = jnp.pad(x.astype(f32),
                 ((0, 0), (0, cinp - Cin),
                  (padding, padding), (padding, padding + (wpitch - Wp))))
    xflat = xp.reshape(N, cinp, Hp * wpitch)
    xflat = jnp.pad(xflat, ((0, 0), (0, 0), (0, lpad - Hp * wpitch))).astype(bf16)

    w2 = jnp.transpose(weight.astype(f32), (0, 2, 3, 1))        # (Cout, K, K, Cin)
    w2 = jnp.pad(w2, ((0, 0), (0, 0), (0, 0), (0, cinp - Cin)))
    w2 = w2.reshape(Cout, kkc).astype(bf16)

    # ---- pass 1: conv (+ streaming BN partial stats), in-kernel im2col ------
    x_spec = pl.BlockSpec((n_tile, cinp, lpad), lambda g: (g, 0, 0))
    w_spec = _const_spec((Cout, kkc), lambda g: (0, 0))
    y_spec = pl.BlockSpec((n_tile, Cout, lenp), lambda g: (g, 0, 0))
    scratch = [pltpu.VMEM((kkc, n_tile * lenp), bf16)]
    cparams = pltpu.CompilerParams(dimension_semantics=("parallel",),
                                   vmem_limit_bytes=32 * 1024 * 1024)

    kern = functools.partial(_conv_im2col_kernel, ksize=K, cinp=cinp,
                             wpitch=wpitch, lenp=lenp, n_tile=n_tile, has_bn=bn)

    if bn:
        mask = np.tile((np.arange(lenp) % wpitch < Wo).astype(np.float32), n_tile)
        mask = jnp.asarray(mask).reshape(1, n_tile * lenp)
        mask_spec = _const_spec((1, n_tile * lenp), lambda g: (0, 0))
        stat_spec = pl.BlockSpec((1, Cout, 1), lambda g: (g, 0, 0))
        y_str, psum, pssq = pl.pallas_call(
            kern,
            grid=(n_steps,),
            in_specs=[x_spec, w_spec, mask_spec],
            out_specs=(y_spec, stat_spec, stat_spec),
            out_shape=(jax.ShapeDtypeStruct((N, Cout, lenp), bf16),
                       jax.ShapeDtypeStruct((n_steps, Cout, 1), f32),
                       jax.ShapeDtypeStruct((n_steps, Cout, 1), f32)),
            scratch_shapes=scratch,
            compiler_params=cparams,
        )(xflat, w2, mask)
        # Fold training-mode BN (biased batch variance) into scale/shift.
        # The conv bias cancels exactly under mean subtraction -> never added.
        count = float(N * Ho * Wo)
        mean = jnp.sum(psum, axis=0) / count                    # (Cout, 1)
        var = jnp.maximum(jnp.sum(pssq, axis=0) / count - mean * mean, 0.0)
        inv = bn_gamma.reshape(Cout, 1).astype(f32) * lax.rsqrt(var + bn_eps)
        scale = inv.reshape(Cout, 1, 1)
        shift = (bn_beta.reshape(Cout, 1).astype(f32) - mean * inv).reshape(Cout, 1, 1)
    else:
        y_str = pl.pallas_call(
            kern,
            grid=(n_steps,),
            in_specs=[x_spec, w_spec],
            out_specs=y_spec,
            out_shape=jax.ShapeDtypeStruct((N, Cout, lenp), bf16),
            scratch_shapes=scratch,
            compiler_params=cparams,
        )(xflat, w2)
        scale = jnp.ones((Cout, 1, 1), f32)
        b = bias if bias is not None else jnp.zeros((Cout,), f32)
        shift = b.reshape(Cout, 1, 1).astype(f32)

    # Free (metadata-only) view of the strided conv intermediate.
    y4 = y_str.reshape(N, Cout, Ho, wpitch)

    # ---- pass 2: scale/shift (+ReLU) (+separable bilinear upsample) ---------
    has_up = up_size > 0
    outH = up_size if has_up else Ho
    outW = up_size if has_up else Wo

    y4_spec = pl.BlockSpec((n_tile, Cout, Ho, wpitch), lambda g: (g, 0, 0, 0))
    vec_spec = _const_spec((Cout, 1, 1), lambda g: (0, 0, 0))
    o_spec = pl.BlockSpec((n_tile, Cout, outH, outW), lambda g: (g, 0, 0, 0))

    up_inputs, up_specs = [], []
    if has_up:
        ah = jnp.asarray(_bilinear_matrix(up_size, Ho)).astype(bf16)      # (up, Ho)
        awt = jnp.asarray(_bilinear_matrix(up_size, Wo).T).astype(bf16)   # (Wo, up)
        up_inputs = [ah, awt]
        up_specs = [_const_spec((up_size, Ho), lambda g: (0, 0)),
                    _const_spec((Wo, up_size), lambda g: (0, 0))]

    out = pl.pallas_call(
        functools.partial(_affine_up_kernel, has_relu=relu, has_up=has_up,
                          wo=Wo, n_tile=n_tile),
        grid=(n_steps,),
        in_specs=[y4_spec, vec_spec, vec_spec] + up_specs,
        out_specs=o_spec,
        out_shape=jax.ShapeDtypeStruct((N, Cout, outH, outW), x.dtype),
        compiler_params=cparams,
    )(y4, scale, shift, *up_inputs)
    return out


# --------------------------- reference & test --------------------------------


def _reference(x, weight, bias, *, padding, relu, bn, gamma, beta, eps, up_size):
    """Plain-JAX f32 reference reproducing the PyTorch forward semantics."""
    y = lax.conv_general_dilated(
        x, weight, window_strides=(1, 1),
        padding=[(padding, padding), (padding, padding)],
        dimension_numbers=('NCHW', 'OIHW', 'NCHW'))
    if bias is not None:
        y = y + bias[None, :, None, None]
    if bn:
        mean = jnp.mean(y, axis=(0, 2, 3), keepdims=True)
        var = jnp.mean((y - mean) ** 2, axis=(0, 2, 3), keepdims=True)
        y = (y - mean) * lax.rsqrt(var + eps)
        y = y * gamma[None, :, None, None] + beta[None, :, None, None]
    if relu:
        y = jnp.maximum(y, 0.0)
    if up_size > 0:
        Ah = jnp.asarray(_bilinear_matrix(up_size, y.shape[2]))
        Aw = jnp.asarray(_bilinear_matrix(up_size, y.shape[3]))
        y = jnp.einsum('uh,nchw->ncuw', Ah, y)
        y = jnp.einsum('vw,ncuw->ncuv', Aw, y)
    return y


if __name__ == "__main__":
    key = jax.random.PRNGKey(0)
    kx, kw, kb = jax.random.split(key, 3)

    N, Cin, H, W = 2, 4, 16, 16
    Cout, K = 8, 3

    x = jax.random.normal(kx, (N, Cin, H, W), jnp.float32)
    weight = jax.random.normal(kw, (Cout, Cin, K, K), jnp.float32) * 0.1
    bias = jax.random.normal(kb, (Cout,), jnp.float32) * 0.1
    gamma = jnp.ones((Cout,), jnp.float32)   # nn.BatchNorm2d affine init
    beta = jnp.zeros((Cout,), jnp.float32)

    # bf16 MXU operands -> compare against the f32 reference with bf16 tolerance.
    rtol = atol = 2e-2

    # Config 1: BasicConv defaults (conv + bias only), kernel_size=3, padding=1.
    out1 = basic_conv(x, weight, bias, padding=1)
    jax.block_until_ready(out1)
    ref1 = _reference(x, weight, bias, padding=1, relu=False, bn=False,
                      gamma=gamma, beta=beta, eps=1e-5, up_size=0)
    assert out1.shape == (N, Cout, H, W)
    np.testing.assert_allclose(np.asarray(out1), np.asarray(ref1),
                               rtol=rtol, atol=atol)

    # Config 2: conv + bias + BN (training-mode stats) + ReLU + upsample 32x32.
    up = 32
    out2 = basic_conv(x, weight, bias, padding=1, relu=True, bn=True,
                      bn_gamma=gamma, bn_beta=beta, bn_eps=1e-5, up_size=up)
    jax.block_until_ready(out2)
    ref2 = _reference(x, weight, bias, padding=1, relu=True, bn=True,
                      gamma=gamma, beta=beta, eps=1e-5, up_size=up)
    assert out2.shape == (N, Cout, up, up)
    np.testing.assert_allclose(np.asarray(out2), np.asarray(ref2),
                               rtol=rtol, atol=atol)

    print("KERNEL_OK")
</pallas_src>

<mosaic_0001>
module attributes {stable_mosaic.version = 11 : i64} {
  func.func @_conv_im2col_kernel(%arg0: i32, %arg1: memref<2x8x512xbf16, #tpu.memory_space<vmem>>, %arg2: memref<8x72xbf16, #tpu.memory_space<vmem>>, %arg3: memref<2x8x384xbf16, #tpu.memory_space<vmem>>, %arg4: memref<72x768xbf16, #tpu.memory_space<vmem>>) attributes {dimension_semantics = [#tpu.dimension_semantics<parallel>], iteration_bounds = array<i64: 1>, scalar_prefetch = 0 : i64, scratch_operands = 1 : i64, tpu.core_type = #tpu.core_type<tc>, window_params = [{transform_indices = @transform_0, window_bounds = array<i64: 2, 8, 512>}, {pipeline_mode = #tpu.pipeline_mode<synchronous>, transform_indices = @transform_1, window_bounds = array<i64: 8, 72>}, {transform_indices = @transform_2, window_bounds = array<i64: 2, 8, 384>}]} {
    %c0 = arith.constant 0 : index
    %c0_0 = arith.constant 0 : index
    %c0_1 = arith.constant 0 : index
    %0 = vector.load %arg1[%c0, %c0_0, %c0_1] : memref<2x8x512xbf16, #tpu.memory_space<vmem>>, vector<1x8x384xbf16>
    %1 = vector.shape_cast %0 : vector<1x8x384xbf16> to vector<8x384xbf16>
    %c0_2 = arith.constant 0 : index
    %c0_3 = arith.constant 0 : index
    %2 = vector.load %arg4[%c0_2, %c0_3] : memref<72x768xbf16, #tpu.memory_space<vmem>>, vector<8x384xbf16>
    tpu.vector_store %arg4[%c0_2, %c0_3], %1 {strides = array<i32>} : memref<72x768xbf16, #tpu.memory_space<vmem>>, vector<8x384xbf16>,
    %c0_4 = arith.constant 0 : index
    %c0_5 = arith.constant 0 : index
    %c1 = arith.constant 1 : index
    %3 = vector.load %arg1[%c0_4, %c0_5, %c1] : memref<2x8x512xbf16, #tpu.memory_space<vmem>>, vector<1x8x384xbf16>
    %4 = vector.shape_cast %3 : vector<1x8x384xbf16> to vector<8x384xbf16>
    %c8 = arith.constant 8 : index
    %c0_6 = arith.constant 0 : index
    %5 = vector.load %arg4[%c8, %c0_6] : memref<72x768xbf16, #tpu.memory_space<vmem>>, vector<8x384xbf16>
    tpu.vector_store %arg4[%c8, %c0_6], %4 {strides = array<i32>} : memref<72x768xbf16, #tpu.memory_space<vmem>>, vector<8x384xbf16>,
    %c0_7 = arith.constant 0 : index
    %c0_8 = arith.constant 0 : index
    %c2 = arith.constant 2 : index
    %6 = vector.load %arg1[%c0_7, %c0_8, %c2] : memref<2x8x512xbf16, #tpu.memory_space<vmem>>, vector<1x8x384xbf16>
    %7 = vector.shape_cast %6 : vector<1x8x384xbf16> to vector<8x384xbf16>
    %c16 = arith.constant 16 : index
    %c0_9 = arith.constant 0 : index
    %8 = vector.load %arg4[%c16, %c0_9] : memref<72x768xbf16, #tpu.memory_space<vmem>>, vector<8x384xbf16>
    tpu.vector_store %arg4[%c16, %c0_9], %7 {strides = array<i32>} : memref<72x768xbf16, #tpu.memory_space<vmem>>, vector<8x384xbf16>,
    %c0_10 = arith.constant 0 : index
    %c0_11 = arith.constant 0 : index
    %c24 = arith.constant 24 : index
    %9 = vector.load %arg1[%c0_10, %c0_11, %c24] : memref<2x8x512xbf16, #tpu.memory_space<vmem>>, vector<1x8x384xbf16>
    %10 = vector.shape_cast %9 : vector<1x8x384xbf16> to vector<8x384xbf16>
    %c24_12 = arith.constant 24 : index
    %c0_13 = arith.constant 0 : index
    %11 = vector.load %arg4[%c24_12, %c0_13] : memref<72x768xbf16, #tpu.memory_space<vmem>>, vector<8x384xbf16>
    tpu.vector_store %arg4[%c24_12, %c0_13], %10 {strides = array<i32>} : memref<72x768xbf16, #tpu.memory_space<vmem>>, vector<8x384xbf16>,
    %c0_14 = arith.constant 0 : index
    %c0_15 = arith.constant 0 : index
    %c25 = arith.constant 25 : index
    %12 = vector.load %arg1[%c0_14, %c0_15, %c25] : memref<2x8x512xbf16, #tpu.memory_space<vmem>>, vector<1x8x384xbf16>
    %13 = vector.shape_cast %12 : vector<1x8x384xbf16> to vector<8x384xbf16>
    %c32 = arith.constant 32 : index
    %c0_16 = arith.constant 0 : index
    %14 = vector.load %arg4[%c32, %c0_16] : memref<72x768xbf16, #tpu.memory_space<vmem>>, vector<8x384xbf16>
    tpu.vector_store %arg4[%c32, %c0_16], %13 {strides = array<i32>} : memref<72x768xbf16, #tpu.memory_space<vmem>>, vector<8x384xbf16>,
    %c0_17 = arith.constant 0 : index
    %c0_18 = arith.constant 0 : index
    %c26 = arith.constant 26 : index
    %15 = vector.load %arg1[%c0_17, %c0_18, %c26] : memref<2x8x512xbf16, #tpu.memory_space<vmem>>, vector<1x8x384xbf16>
    %16 = vector.shape_cast %15 : vector<1x8x384xbf16> to vector<8x384xbf16>
    %c40 = arith.constant 40 : index
    %c0_19 = arith.constant 0 : index
    %17 = vector.load %arg4[%c40, %c0_19] : memref<72x768xbf16, #tpu.memory_space<vmem>>, vector<8x384xbf16>
    tpu.vector_store %arg4[%c40, %c0_19], %16 {strides = array<i32>} : memref<72x768xbf16, #tpu.memory_space<vmem>>, vector<8x384xbf16>,
    %c0_20 = arith.constant 0 : index
    %c0_21 = arith.constant 0 : index
    %c48 = arith.constant 48 : index
    %18 = vector.load %arg1[%c0_20, %c0_21, %c48] : memref<2x8x512xbf16, #tpu.memory_space<vmem>>, vector<1x8x384xbf16>
    %19 = vector.shape_cast %18 : vector<1x8x384xbf16> to vector<8x384xbf16>
    %c48_22 = arith.constant 48 : index
    %c0_23 = arith.constant 0 : index
    %20 = vector.load %arg4[%c48_22, %c0_23] : memref<72x768xbf16, #tpu.memory_space<vmem>>, vector<8x384xbf16>
    tpu.vector_store %arg4[%c48_22, %c0_23], %19 {strides = array<i32>} : memref<72x768xbf16, #tpu.memory_space<vmem>>, vector<8x384xbf16>,
    %c0_24 = arith.constant 0 : index
    %c0_25 = arith.constant 0 : index
    %c49 = arith.constant 49 : index
    %21 = vector.load %arg1[%c0_24, %c0_25, %c49] : memref<2x8x512xbf16, #tpu.memory_space<vmem>>, vector<1x8x384xbf16>
    %22 = vector.shape_cast %21 : vector<1x8x384xbf16> to vector<8x384xbf16>
    %c56 = arith.constant 56 : index
    %c0_26 = arith.constant 0 : index
    %23 = vector.load %arg4[%c56, %c0_26] : memref<72x768xbf16, #tpu.memory_space<vmem>>, vector<8x384xbf16>
    tpu.vector_store %arg4[%c56, %c0_26], %22 {strides = array<i32>} : memref<72x768xbf16, #tpu.memory_space<vmem>>, vector<8x384xbf16>,
    %c0_27 = arith.constant 0 : index
    %c0_28 = arith.constant 0 : index
    %c50 = arith.constant 50 : index
    %24 = vector.load %arg1[%c0_27, %c0_28, %c50] : memref<2x8x512xbf16, #tpu.memory_space<vmem>>, vector<1x8x384xbf16>
    %25 = vector.shape_cast %24 : vector<1x8x384xbf16> to vector<8x384xbf16>
    %c64 = arith.constant 64 : index
    %c0_29 = arith.constant 0 : index
    %26 = vector.load %arg4[%c64, %c0_29] : memref<72x768xbf16, #tpu.memory_space<vmem>>, vector<8x384xbf16>
    tpu.vector_store %arg4[%c64, %c0_29], %25 {strides = array<i32>} : memref<72x768xbf16, #tpu.memory_space<vmem>>, vector<8x384xbf16>,
    %c1_30 = arith.constant 1 : index
    %c0_31 = arith.constant 0 : index
    %c0_32 = arith.constant 0 : index
    %27 = vector.load %arg1[%c1_30, %c0_31, %c0_32] : memref<2x8x512xbf16, #tpu.memory_space<vmem>>, vector<1x8x384xbf16>
    %28 = vector.shape_cast %27 : vector<1x8x384xbf16> to vector<8x384xbf16>
    %c0_33 = arith.constant 0 : index
    %c384 = arith.constant 384 : index
    %29 = vector.load %arg4[%c0_33, %c384] : memref<72x768xbf16, #tpu.memory_space<vmem>>, vector<8x384xbf16>
    tpu.vector_store %arg4[%c0_33, %c384], %28 {strides = array<i32>} : memref<72x768xbf16, #tpu.memory_space<vmem>>, vector<8x384xbf16>,
    %c1_34 = arith.constant 1 : index
    %c0_35 = arith.constant 0 : index
    %c1_36 = arith.constant 1 : index
    %30 = vector.load %arg1[%c1_34, %c0_35, %c1_36] : memref<2x8x512xbf16, #tpu.memory_space<vmem>>, vector<1x8x384xbf16>
    %31 = vector.shape_cast %30 : vector<1x8x384xbf16> to vector<8x384xbf16>
    %c8_37 = arith.constant 8 : index
    %c384_38 = arith.constant 384 : index
    %32 = vector.load %arg4[%c8_37, %c384_38] : memref<72x768xbf16, #tpu.memory_space<vmem>>, vector<8x384xbf16>
    tpu.vector_store %arg4[%c8_37, %c384_38], %31 {strides = array<i32>} : memref<72x768xbf16, #tpu.memory_space<vmem>>, vector<8x384xbf16>,
    %c1_39 = arith.constant 1 : index
    %c0_40 = arith.constant 0 : index
    %c2_41 = arith.constant 2 : index
    %33 = vector.load %arg1[%c1_39, %c0_40, %c2_41] : memref<2x8x512xbf16, #tpu.memory_space<vmem>>, vector<1x8x384xbf16>
    %34 = vector.shape_cast %33 : vector<1x8x384xbf16> to vector<8x384xbf16>
    %c16_42 = arith.constant 16 : index
    %c384_43 = arith.constant 384 : index
    %35 = vector.load %arg4[%c16_42, %c384_43] : memref<72x768xbf16, #tpu.memory_space<vmem>>, vector<8x384xbf16>
    tpu.vector_store %arg4[%c16_42, %c384_43], %34 {strides = array<i32>} : memref<72x768xbf16, #tpu.memory_space<vmem>>, vector<8x384xbf16>,
    %c1_44 = arith.constant 1 : index
    %c0_45 = arith.constant 0 : index
    %c24_46 = arith.constant 24 : index
    %36 = vector.load %arg1[%c1_44, %c0_45, %c24_46] : memref<2x8x512xbf16, #tpu.memory_space<vmem>>, vector<1x8x384xbf16>
    %37 = vector.shape_cast %36 : vector<1x8x384xbf16> to vector<8x384xbf16>
    %c24_47 = arith.constant 24 : index
    %c384_48 = arith.constant 384 : index
    %38 = vector.load %arg4[%c24_47, %c384_48] : memref<72x768xbf16, #tpu.memory_space<vmem>>, vector<8x384xbf16>
    tpu.vector_store %arg4[%c24_47, %c384_48], %37 {strides = array<i32>} : memref<72x768xbf16, #tpu.memory_space<vmem>>, vector<8x384xbf16>,
    %c1_49 = arith.constant 1 : index
    %c0_50 = arith.constant 0 : index
    %c25_51 = arith.constant 25 : index
    %39 = vector.load %arg1[%c1_49, %c0_50, %c25_51] : memref<2x8x512xbf16, #tpu.memory_space<vmem>>, vector<1x8x384xbf16>
    %40 = vector.shape_cast %39 : vector<1x8x384xbf16> to vector<8x384xbf16>
    %c32_52 = arith.constant 32 : index
    %c384_53 = arith.constant 384 : index
    %41 = vector.load %arg4[%c32_52, %c384_53] : memref<72x768xbf16, #tpu.memory_space<vmem>>, vector<8x384xbf16>
    tpu.vector_store %arg4[%c32_52, %c384_53], %40 {strides = array<i32>} : memref<72x768xbf16, #tpu.memory_space<vmem>>, vector<8x384xbf16>,
    %c1_54 = arith.constant 1 : index
    %c0_55 = arith.constant 0 : index
    %c26_56 = arith.constant 26 : index
    %42 = vector.load %arg1[%c1_54, %c0_55, %c26_56] : memref<2x8x512xbf16, #tpu.memory_space<vmem>>, vector<1x8x384xbf16>
    %43 = vector.shape_cast %42 : vector<1x8x384xbf16> to vector<8x384xbf16>
    %c40_57 = arith.constant 40 : index
    %c384_58 = arith.constant 384 : index
    %44 = vector.load %arg4[%c40_57, %c384_58] : memref<72x768xbf16, #tpu.memory_space<vmem>>, vector<8x384xbf16>
    tpu.vector_store %arg4[%c40_57, %c384_58], %43 {strides = array<i32>} : memref<72x768xbf16, #tpu.memory_space<vmem>>, vector<8x384xbf16>,
    %c1_59 = arith.constant 1 : index
    %c0_60 = arith.constant 0 : index
    %c48_61 = arith.constant 48 : index
    %45 = vector.load %arg1[%c1_59, %c0_60, %c48_61] : memref<2x8x512xbf16, #tpu.memory_space<vmem>>, vector<1x8x384xbf16>
    %46 = vector.shape_cast %45 : vector<1x8x384xbf16> to vector<8x384xbf16>
    %c48_62 = arith.constant 48 : index
    %c384_63 = arith.constant 384 : index
    %47 = vector.load %arg4[%c48_62, %c384_63] : memref<72x768xbf16, #tpu.memory_space<vmem>>, vector<8x384xbf16>
    tpu.vector_store %arg4[%c48_62, %c384_63], %46 {strides = array<i32>} : memref<72x768xbf16, #tpu.memory_space<vmem>>, vector<8x384xbf16>,
    %c1_64 = arith.constant 1 : index
    %c0_65 = arith.constant 0 : index
    %c49_66 = arith.constant 49 : index
    %48 = vector.load %arg1[%c1_64, %c0_65, %c49_66] : memref<2x8x512xbf16, #tpu.memory_space<vmem>>, vector<1x8x384xbf16>
    %49 = vector.shape_cast %48 : vector<1x8x384xbf16> to vector<8x384xbf16>
    %c56_67 = arith.constant 56 : index
    %c384_68 = arith.constant 384 : index
    %50 = vector.load %arg4[%c56_67, %c384_68] : memref<72x768xbf16, #tpu.memory_space<vmem>>, vector<8x384xbf16>
    tpu.vector_store %arg4[%c56_67, %c384_68], %49 {strides = array<i32>} : memref<72x768xbf16, #tpu.memory_space<vmem>>, vector<8x384xbf16>,
    %c1_69 = arith.constant 1 : index
    %c0_70 = arith.constant 0 : index
    %c50_71 = arith.constant 50 : index
    %51 = vector.load %arg1[%c1_69, %c0_70, %c50_71] : memref<2x8x512xbf16, #tpu.memory_space<vmem>>, vector<1x8x384xbf16>
    %52 = vector.shape_cast %51 : vector<1x8x384xbf16> to vector<8x384xbf16>
    %c64_72 = arith.constant 64 : index
    %c384_73 = arith.constant 384 : index
    %53 = vector.load %arg4[%c64_72, %c384_73] : memref<72x768xbf16, #tpu.memory_space<vmem>>, vector<8x384xbf16>
    tpu.vector_store %arg4[%c64_72, %c384_73], %52 {strides = array<i32>} : memref<72x768xbf16, #tpu.memory_space<vmem>>, vector<8x384xbf16>,
    %c0_74 = arith.constant 0 : index
    %c0_75 = arith.constant 0 : index
    %54 = vector.load %arg2[%c0_74, %c0_75] : memref<8x72xbf16, #tpu.memory_space<vmem>>, vector<8x72xbf16>
    %c0_76 = arith.constant 0 : index
    %c0_77 = arith.constant 0 : index
    %55 = vector.load %arg4[%c0_76, %c0_77] : memref<72x768xbf16, #tpu.memory_space<vmem>>, vector<72x768xbf16>
    %cst = arith.constant dense<0.000000e+00> : vector<8x768xf32>
    %56 = tpu.matmul %54, %55, %cst {dimension_numbers = #tpu.dot_dimension_numbers<[1], [0], [0], [1], [0, 0, 1, 1], [], []>} : vector<8x72xbf16>, vector<72x768xbf16>, vector<8x768xf32> -> vector<8x768xf32>
    %57 = vector.extract_strided_slice %56 {offsets = [0, 0], sizes = [8, 384], strides = [1, 1]} : vector<8x768xf32> to vector<8x384xf32>
    %58 = arith.truncf %57 : vector<8x384xf32> to vector<8x384xbf16>
    %c0_78 = arith.constant 0 : index
    %c0_79 = arith.constant 0 : index
    %c0_80 = arith.constant 0 : index
    %59 = vector.load %arg3[%c0_78, %c0_79, %c0_80] : memref<2x8x384xbf16, #tpu.memory_space<vmem>>, vector<1x8x384xbf16>
    %60 = vector.shape_cast %59 : vector<1x8x384xbf16> to vector<8x384xbf16>
    %61 = vector.shape_cast %58 : vector<8x384xbf16> to vector<1x8x384xbf16>
    tpu.vector_store %arg3[%c0_78, %c0_79, %c0_80], %61 {strides = array<i32>} : memref<2x8x384xbf16, #tpu.memory_space<vmem>>, vector<1x8x384xbf16>,
    %62 = vector.extract_strided_slice %56 {offsets = [0, 384], sizes = [8, 384], strides = [1, 1]} : vector<8x768xf32> to vector<8x384xf32>
    %63 = arith.truncf %62 : vector<8x384xf32> to vector<8x384xbf16>
    %c1_81 = arith.constant 1 : index
    %c0_82 = arith.constant 0 : index
    %c0_83 = arith.constant 0 : index
    %64 = vector.load %arg3[%c1_81, %c0_82, %c0_83] : memref<2x8x384xbf16, #tpu.memory_space<vmem>>, vector<1x8x384xbf16>
    %65 = vector.shape_cast %64 : vector<1x8x384xbf16> to vector<8x384xbf16>
    %66 = vector.shape_cast %63 : vector<8x384xbf16> to vector<1x8x384xbf16>
    tpu.vector_store %arg3[%c1_81, %c0_82, %c0_83], %66 {strides = array<i32>} : memref<2x8x384xbf16, #tpu.memory_space<vmem>>, vector<1x8x384xbf16>,
    return
  }
  func.func @transform_0(%arg0: i32) -> (i32, i32, i32) {
    %c0_i32 = arith.constant 0 : i32
    %c0_i32_0 = arith.constant 0 : i32
    %c0_i32_1 = arith.constant 0 : i32
    return %arg0, %c0_i32, %c0_i32_0 : i32, i32, i32
  }
  func.func @transform_1(%arg0: i32) -> (i32, i32) {
    %c0_i32 = arith.constant 0 : i32
    %c0_i32_0 = arith.constant 0 : i32
    %c0_i32_1 = arith.constant 0 : i32
    return %c0_i32, %c0_i32_0 : i32, i32
  }
  func.func @transform_2(%arg0: i32) -> (i32, i32, i32) {
    %c0_i32 = arith.constant 0 : i32
    %c0_i32_0 = arith.constant 0 : i32
    %c0_i32_1 = arith.constant 0 : i32
    return %arg0, %c0_i32, %c0_i32_0 : i32, i32, i32
  }
}

</mosaic_0001>

<llo_original>
// kernel: tpu_custom_call.1
$region0: #{tpu_custom_call.1}
  #allocation0 [shape = 'u32[]', space=smem, size = 0x4, offset = 0x4, fixed_abs, tag = 'smem constant byte address 0x4 - core index']
  #allocation1 [shape = 'u32[144,128]{1,0:T(1,128)}', space=vmem, size = 0x12000, scoped, tag = 'internal scratch']
  #allocation2 [shape = 'bf16[72,768]{1,0:T(8,128)(2,1)}', space=vmem, size = 0x1b000, scoped, tag = 'scratch operand']
  %s0 = inlined_call_operand.hbm [shape: bf16[2,8,512], index: 0, kind: input, shape index: {}]
  %s1 = inlined_call_operand.hbm [shape: bf16[8,72], index: 1, kind: input, shape index: {}]
  %s2 = inlined_call_operand.hbm [shape: bf16[2,8,384], index: 2, kind: output, shape index: {}]
  %s3 = sld [smem:[#allocation0]]
  $region26: #{tpu_custom_call.1} parent=0
    _
  %s5 = ssub.s32 1, %s3
  %s6 = scalar_select 0, %s5, %s3
  $region1: #{tpu_custom_call.1} parent=0
    #allocation3 [shape = 'u8[16384]{0}', space=vmem, size = 0x4000, scoped, tag = 'input window, operand 0, single buffered']
    #allocation4 [shape = 's32[1]{0}', space=sflag, size = 0x4, scoped, tag = 'scoped memory for tpu_custom_call.1']
    #allocation5 [shape = 's32[1]{0}', space=sflag, size = 0x4, scoped, tag = 'scoped memory for tpu_custom_call.1']
    #allocation6 [shape = 'u8[2048]{0}', space=vmem, size = 0x800, scoped, tag = 'input window, operand 1, single buffered']
    #allocation7 [shape = 's32[1]{0}', space=sflag, size = 0x4, scoped, tag = 'scoped memory for tpu_custom_call.1']
    #allocation8 [shape = 'u8[12288]{0}', space=vmem, size = 0x3000, scoped, tag = 'output window, operand 0, single buffered']
    %7 = vsyncpa [#allocation4], 0
    %8 = vsyncpa [#allocation7], 0
    %9 = vsyncpa [#allocation5], 0
    // Predicated region
    $region2: #{tpu_custom_call.1} parent=1 // pred_check
      _
    $region3: #{tpu_custom_call.1} parent=1 // pred_check_branch
      %11 = sbr.rel (0) target = $region5
    $region4: #{tpu_custom_call.1} parent=1 // pred_region
      %s13 = ssub.s32 512, 512
      %14 = vsyncadd [#allocation4], %s13
      %s15 = sshll.u32 [#allocation3], 4
      %s16 = int_to_ptr.vmem [resolvable:$true] %s15
      %21 = dma.hbm_to_vmem [thread:$0]  %s0, 512, %s16, [#allocation4], 256, 256, 16
    $region5: #{tpu_custom_call.1} parent=1 // pred_fallthru
      _
    // Predicated region
    $region6: #{tpu_custom_call.1} parent=1 // pred_check
      _
    $region7: #{tpu_custom_call.1} parent=1 // pred_check_branch
      %23 = sbr.rel (0) target = $region9
    $region8: #{tpu_custom_call.1} parent=1 // pred_region
      %s25 = ssub.s32 64, 64
      %26 = vsyncadd [#allocation7], %s25
      %s28 = sshll.u32 [#allocation6], 4
      %s29 = int_to_ptr.vmem [resolvable:$true] %s28
      %31 = dma.hbm_to_vmem [thread:$0]  %s1, 64, %s29, [#allocation7]
    $region9: #{tpu_custom_call.1} parent=1 // pred_fallthru
      _
    // Predicated region
    $region10: #{tpu_custom_call.1} parent=1 // pred_check
      _
    $region11: #{tpu_custom_call.1} parent=1 // pred_check_branch
      %33 = sbr.rel (0) target = $region13
    $region12: #{tpu_custom_call.1} parent=1 // pred_region
      %34 = dma.done [#allocation4], 512
    $region13: #{tpu_custom_call.1} parent=1 // pred_fallthru
      _
    // Predicated region
    $region14: #{tpu_custom_call.1} parent=1 // pred_check
      _
    $region15: #{tpu_custom_call.1} parent=1 // pred_check_branch
      %36 = sbr.rel (0) target = $region17
    $region16: #{tpu_custom_call.1} parent=1 // pred_region
      %37 = dma.done [#allocation7], 64
    $region17: #{tpu_custom_call.1} parent=1 // pred_fallthru
      _
    %v39 = vld [vmem:[#allocation3] sm:$0xff]
    %v40 = vld [vmem:[#allocation3 + $0x8] sm:$0xf]
    %41 = vst [vmem:[#allocation2] sm:$0xff] %v39
    %42 = vst [vmem:[#allocation2 + $0x8] sm:$0xf] %v40
    %v43 = vld [vmem:[#allocation3] sm:$0xff]
    %v44 = vld [vmem:[#allocation3 + $0x8] sm:$0xff]
    %47 = vrot.lane.b32.xlu0 %v43, 127
    %v48 = vpop.permute.xlu0 %47
    %49 = vrot.lane.b32.xlu0 %v44, 127
    %v50 = vpop.permute.xlu0 %49
    %v51 = vrot.slane %v48, 4
    %v52 = vrot.slane %v50, 4
    %vm53 = vcmask 1043456
    %v54 = vsel %vm53, %v51, %v52
    %vm55 = vcmask 1039360
    %v56 = vsel %vm55, %v48, %v54
    %v57 = vsel %vm55, %v50, %v52
    %60 = vst [vmem:[#allocation2 + $0x18] sm:$0xff] %v56
    %61 = vst [vmem:[#allocation2 + $0x20] sm:$0xf] %v57
    %v62 = vld [vmem:[#allocation3] sm:$0xff]
    %v63 = vld [vmem:[#allocation3 + $0x8] sm:$0xff]
    %66 = vrot.lane.b32.xlu0 %v62, 126
    %v67 = vpop.permute.xlu0 %66
    %68 = vrot.lane.b32.xlu0 %v63, 126
    %v69 = vpop.permute.xlu0 %68
    %v70 = vrot.slane %v67, 4
    %v71 = vrot.slane %v69, 4
    %v72 = vsel %vm53, %v70, %v71
    %vm73 = vcmask 1031168
    %v74 = vsel %vm73, %v67, %v72
    %v75 = vsel %vm73, %v69, %v71
    %78 = vst [vmem:[#allocation2 + $0x30] sm:$0xff] %v74
    %79 = vst [vmem:[#allocation2 + $0x38] sm:$0xf] %v75
    %v80 = vld [vmem:[#allocation3] sm:$0xff]
    %v81 = vld [vmem:[#allocation3 + $0x8] sm:$0xff]
    %84 = vrot.lane.b32.xlu0 %v80, 104
    %v85 = vpop.permute.xlu0 %84
    %86 = vrot.lane.b32.xlu0 %v81, 104
    %v87 = vpop.permute.xlu0 %86
    %v88 = vrot.slane %v85, 4
    %v89 = vrot.slane %v87, 4
    %v90 = vsel %vm53, %v88, %v89
    %vm91 = vcmask 850944
    %v92 = vsel %vm91, %v85, %v90
    %v93 = vsel %vm91, %v87, %v89
    %96 = vst [vmem:[#allocation2 + $0x48] sm:$0xff] %v92
    %97 = vst [vmem:[#allocation2 + $0x50] sm:$0xf] %v93
    %v98 = vld [vmem:[#allocation3] sm:$0xff]
    %v99 = vld [vmem:[#allocation3 + $0x8] sm:$0xff]
    %102 = vrot.lane.b32.xlu0 %v98, 103
    %v103 = vpop.permute.xlu0 %102
    %104 = vrot.lane.b32.xlu0 %v99, 103
    %v105 = vpop.permute.xlu0 %104
    %v106 = vrot.slane %v103, 4
    %v107 = vrot.slane %v105, 4
    %v108 = vsel %vm53, %v106, %v107
    %vm109 = vcmask 842752
    %v110 = vsel %vm109, %v103, %v108
    %v111 = vsel %vm109, %v105, %v107
    %114 = vst [vmem:[#allocation2 + $0x60] sm:$0xff] %v110
    %115 = vst [vmem:[#allocation2 + $0x68] sm:$0xf] %v111
    %v116 = vld [vmem:[#allocation3] sm:$0xff]
    %v117 = vld [vmem:[#allocation3 + $0x8] sm:$0xff]
    %120 = vrot.lane.b32.xlu0 %v116, 102
    %v121 = vpop.permute.xlu0 %120
    %122 = vrot.lane.b32.xlu0 %v117, 102
    %v123 = vpop.permute.xlu0 %122
    %v124 = vrot.slane %v121, 4
    %v125 = vrot.slane %v123, 4
    %v126 = vsel %vm53, %v124, %v125
    %vm127 = vcmask 834560
    %v128 = vsel %vm127, %v121, %v126
    %v129 = vsel %vm127, %v123, %v125
    %132 = vst [vmem:[#allocation2 + $0x78] sm:$0xff] %v128
    %133 = vst [vmem:[#allocation2 + $0x80] sm:$0xf] %v129
    %v134 = vld [vmem:[#allocation3] sm:$0xff]
    %v135 = vld [vmem:[#allocation3 + $0x8] sm:$0xff]
    %138 = vrot.lane.b32.xlu0 %v134, 80
    %v139 = vpop.permute.xlu0 %138
    %140 = vrot.lane.b32.xlu0 %v135, 80
    %v141 = vpop.permute.xlu0 %140
    %v142 = vrot.slane %v139, 4
    %v143 = vrot.slane %v141, 4
    %v144 = vsel %vm53, %v142, %v143
    %vm145 = vcmask 654336
    %v146 = vsel %vm145, %v139, %v144
    %v147 = vsel %vm145, %v141, %v143
    %150 = vst [vmem:[#allocation2 + $0x90] sm:$0xff] %v146
    %151 = vst [vmem:[#allocation2 + $0x98] sm:$0xf] %v147
    %v152 = vld [vmem:[#allocation3] sm:$0xff]
    %v153 = vld [vmem:[#allocation3 + $0x8] sm:$0xff]
    %156 = vrot.lane.b32.xlu0 %v152, 79
    %v157 = vpop.permute.xlu0 %156
    %158 = vrot.lane.b32.xlu0 %v153, 79
    %v159 = vpop.permute.xlu0 %158
    %v160 = vrot.slane %v157, 4
    %v161 = vrot.slane %v159, 4
    %v162 = vsel %vm53, %v160, %v161
    %vm163 = vcmask 646144
    %v164 = vsel %vm163, %v157, %v162
    %v165 = vsel %vm163, %v159, %v161
    %168 = vst [vmem:[#allocation2 + $0xa8] sm:$0xff] %v164
    %169 = vst [vmem:[#allocation2 + $0xb0] sm:$0xf] %v165
    %v170 = vld [vmem:[#allocation3] sm:$0xff]
    %v171 = vld [vmem:[#allocation3 + $0x8] sm:$0xff]
    %174 = vrot.lane.b32.xlu0 %v170, 78
    %v175 = vpop.permute.xlu0 %174
    %176 = vrot.lane.b32.xlu0 %v171, 78
    %v177 = vpop.permute.xlu0 %176
    %v178 = vrot.slane %v175, 4
    %v179 = vrot.slane %v177, 4
    %v180 = vsel %vm53, %v178, %v179
    %vm181 = vcmask 637952
    %v182 = vsel %vm181, %v175, %v180
    %v183 = vsel %vm181, %v177, %v179
    %186 = vst [vmem:[#allocation2 + $0xc0] sm:$0xff] %v182
    %187 = vst [vmem:[#allocation2 + $0xc8] sm:$0xf] %v183
    %s188 = scalar_lea.vmem [#allocation3], 16
    %v189 = vld [vmem:[%s188] sm:$0xff]
    %v190 = vld [vmem:[%s188 + $0x8] sm:$0xf]
    %191 = vst [vmem:[#allocation2 + $0xc] sm:$0xff] %v189
    %192 = vst [vmem:[#allocation2 + $0x14] sm:$0xf] %v190
    %v193 = vld [vmem:[%s188] sm:$0xff]
    %v194 = vld [vmem:[%s188 + $0x8] sm:$0xff]
    %197 = vrot.lane.b32.xlu0 %v193, 127
    %v198 = vpop.permute.xlu0 %197
    %199 = vrot.lane.b32.xlu0 %v194, 127
    %v200 = vpop.permute.xlu0 %199
    %v201 = vrot.slane %v198, 4
    %v202 = vrot.slane %v200, 4
    %v203 = vsel %vm53, %v201, %v202
    %v204 = vsel %vm55, %v198, %v203
    %v205 = vsel %vm55, %v200, %v202
    %208 = vst [vmem:[#allocation2 + $0x24] sm:$0xff] %v204
    %209 = vst [vmem:[#allocation2 + $0x2c] sm:$0xf] %v205
    %v210 = vld [vmem:[%s188] sm:$0xff]
    %v211 = vld [vmem:[%s188 + $0x8] sm:$0xff]
    %214 = vrot.lane.b32.xlu0 %v210, 126
    %v215 = vpop.permute.xlu0 %214
    %216 = vrot.lane.b32.xlu0 %v211, 126
    %v217 = vpop.permute.xlu0 %216
    %v218 = vrot.slane %v215, 4
    %v219 = vrot.slane %v217, 4
    %v220 = vsel %vm53, %v218, %v219
    %v221 = vsel %vm73, %v215, %v220
    %v222 = vsel %vm73, %v217, %v219
    %225 = vst [vmem:[#allocation2 + $0x3c] sm:$0xff] %v221
    %226 = vst [vmem:[#allocation2 + $0x44] sm:$0xf] %v222
    %v227 = vld [vmem:[%s188] sm:$0xff]
    %v228 = vld [vmem:[%s188 + $0x8] sm:$0xff]
    %231 = vrot.lane.b32.xlu0 %v227, 104
    %v232 = vpop.permute.xlu0 %231
    %233 = vrot.lane.b32.xlu0 %v228, 104
    %v234 = vpop.permute.xlu0 %233
    %v235 = vrot.slane %v232, 4
    %v236 = vrot.slane %v234, 4
    %v237 = vsel %vm53, %v235, %v236
    %v238 = vsel %vm91, %v232, %v237
    %v239 = vsel %vm91, %v234, %v236
    %242 = vst [vmem:[#allocation2 + $0x54] sm:$0xff] %v238
    %243 = vst [vmem:[#allocation2 + $0x5c] sm:$0xf] %v239
    %v244 = vld [vmem:[%s188] sm:$0xff]
    %v245 = vld [vmem:[%s188 + $0x8] sm:$0xff]
    %248 = vrot.lane.b32.xlu0 %v244, 103
    %v249 = vpop.permute.xlu0 %248
    %250 = vrot.lane.b32.xlu0 %v245, 103
    %v251 = vpop.permute.xlu0 %250
    %v252 = vrot.slane %v249, 4
    %v253 = vrot.slane %v251, 4
    %v254 = vsel %vm53, %v252, %v253
    %v255 = vsel %vm109, %v249, %v254
    %v256 = vsel %vm109, %v251, %v253
    %259 = vst [vmem:[#allocation2 + $0x6c] sm:$0xff] %v255
    %260 = vst [vmem:[#allocation2 + $0x74] sm:$0xf] %v256
    %v261 = vld [vmem:[%s188] sm:$0xff]
    %v262 = vld [vmem:[%s188 + $0x8] sm:$0xff]
    %265 = vrot.lane.b32.xlu0 %v261, 102
    %v266 = vpop.permute.xlu0 %265
    %267 = vrot.lane.b32.xlu0 %v262, 102
    %v268 = vpop.permute.xlu0 %267
    %v269 = vrot.slane %v266, 4
    %v270 = vrot.slane %v268, 4
    %v271 = vsel %vm53, %v269, %v270
    %v272 = vsel %vm127, %v266, %v271
    %v273 = vsel %vm127, %v268, %v270
    %276 = vst [vmem:[#allocation2 + $0x84] sm:$0xff] %v272
    %277 = vst [vmem:[#allocation2 + $0x8c] sm:$0xf] %v273
    %v278 = vld [vmem:[%s188] sm:$0xff]
    %v279 = vld [vmem:[%s188 + $0x8] sm:$0xff]
    %282 = vrot.lane.b32.xlu0 %v278, 80
    %v283 = vpop.permute.xlu0 %282
    %284 = vrot.lane.b32.xlu0 %v279, 80
    %v285 = vpop.permute.xlu0 %284
    %v286 = vrot.slane %v283, 4
    %v287 = vrot.slane %v285, 4
    %v288 = vsel %vm53, %v286, %v287
    %v289 = vsel %vm145, %v283, %v288
    %v290 = vsel %vm145, %v285, %v287
    %293 = vst [vmem:[#allocation2 + $0x9c] sm:$0xff] %v289
    %294 = vst [vmem:[#allocation2 + $0xa4] sm:$0xf] %v290
    %v295 = vld [vmem:[%s188] sm:$0xff]
    %v296 = vld [vmem:[%s188 + $0x8] sm:$0xff]
    %299 = vrot.lane.b32.xlu0 %v295, 79
    %v300 = vpop.permute.xlu0 %299
    %301 = vrot.lane.b32.xlu0 %v296, 79
    %v302 = vpop.permute.xlu0 %301
    %v303 = vrot.slane %v300, 4
    %v304 = vrot.slane %v302, 4
    %v305 = vsel %vm53, %v303, %v304
    %v306 = vsel %vm163, %v300, %v305
    %v307 = vsel %vm163, %v302, %v304
    %310 = vst [vmem:[#allocation2 + $0xb4] sm:$0xff] %v306
    %311 = vst [vmem:[#allocation2 + $0xbc] sm:$0xf] %v307
    %v312 = vld [vmem:[%s188] sm:$0xff]
    %v313 = vld [vmem:[%s188 + $0x8] sm:$0xff]
    %316 = vrot.lane.b32.xlu0 %v312, 78
    %v317 = vpop.permute.xlu0 %316
    %318 = vrot.lane.b32.xlu0 %v313, 78
    %v319 = vpop.permute.xlu0 %318
    %v320 = vrot.slane %v317, 4
    %v321 = vrot.slane %v319, 4
    %v322 = vsel %vm53, %v320, %v321
    %v323 = vsel %vm181, %v317, %v322
    %v324 = vsel %vm181, %v319, %v321
    %327 = vst [vmem:[#allocation2 + $0xcc] sm:$0xff] %v323
    %328 = vst [vmem:[#allocation2 + $0xd4] sm:$0xf] %v324
    %v329 = vld [vmem:[#allocation6] sm:$0xf]
    %v330 = vld [vmem:[#allocation2] sm:$0xff]
    %v331 = vld [vmem:[#allocation2 + $0x8] sm:$0xff]
    %v332 = vld [vmem:[#allocation2 + $0x10] sm:$0xff]
    %v333 = vld [vmem:[#allocation2 + $0x18] sm:$0xff]
    %v334 = vld [vmem:[#allocation2 + $0x20] sm:$0xff]
    %v335 = vld [vmem:[#allocation2 + $0x28] sm:$0xff]
    %v336 = vld [vmem:[#allocation2 + $0x30] sm:$0xff]
    %v337 = vld [vmem:[#allocation2 + $0x38] sm:$0xff]
    %v338 = vld [vmem:[#allocation2 + $0x40] sm:$0xff]
    %v339 = vld [vmem:[#allocation2 + $0x48] sm:$0xff]
    %v340 = vld [vmem:[#allocation2 + $0x50] sm:$0xff]
    %v341 = vld [vmem:[#allocation2 + $0x58] sm:$0xff]
    %v342 = vld [vmem:[#allocation2 + $0x60] sm:$0xff]
    %v343 = vld [vmem:[#allocation2 + $0x68] sm:$0xff]
    %v344 = vld [vmem:[#allocation2 + $0x70] sm:$0xff]
    %v345 = vld [vmem:[#allocation2 + $0x78] sm:$0xff]
    %v346 = vld [vmem:[#allocation2 + $0x80] sm:$0xff]
    %v347 = vld [vmem:[#allocation2 + $0x88] sm:$0xff]
    %v348 = vld [vmem:[#allocation2 + $0x90] sm:$0xff]
    %v349 = vld [vmem:[#allocation2 + $0x98] sm:$0xff]
    %v350 = vld [vmem:[#allocation2 + $0xa0] sm:$0xff]
    %v351 = vld [vmem:[#allocation2 + $0xa8] sm:$0xff]
    %v352 = vld [vmem:[#allocation2 + $0xb0] sm:$0xff]
    %v353 = vld [vmem:[#allocation2 + $0xb8] sm:$0xff]
    %v354 = vld [vmem:[#allocation2 + $0xc0] sm:$0xff]
    %v355 = vld [vmem:[#allocation2 + $0xc8] sm:$0xff]
    %v356 = vld [vmem:[#allocation2 + $0xd0] sm:$0xff]
    %v384 = vunpack.c.l.b16 %v330
    %v385 = vunpack.c.h.b16 %v330
    %v386 = vunpack.c.l.b16 %v331
    %v387 = vunpack.c.h.b16 %v331
    %v388 = vunpack.c.l.b16 %v332
    %v389 = vunpack.c.h.b16 %v332
    %v390 = vunpack.c.l.b16 %v333
    %v391 = vunpack.c.h.b16 %v333
    %v392 = vunpack.c.l.b16 %v334
    %v393 = vunpack.c.h.b16 %v334
    %v394 = vunpack.c.l.b16 %v335
    %v395 = vunpack.c.h.b16 %v335
    %v396 = vunpack.c.l.b16 %v336
    %v397 = vunpack.c.h.b16 %v336
    %v398 = vunpack.c.l.b16 %v337
    %v399 = vunpack.c.h.b16 %v337
    %v400 = vunpack.c.l.b16 %v338
    %v401 = vunpack.c.h.b16 %v338
    %v402 = vunpack.c.l.b16 %v339
    %v403 = vunpack.c.h.b16 %v339
    %v404 = vunpack.c.l.b16 %v340
    %v405 = vunpack.c.h.b16 %v340
    %v406 = vunpack.c.l.b16 %v341
    %v407 = vunpack.c.h.b16 %v341
    %v408 = vunpack.c.l.b16 %v342
    %v409 = vunpack.c.h.b16 %v342
    %v410 = vunpack.c.l.b16 %v343
    %v411 = vunpack.c.h.b16 %v343
    %v412 = vunpack.c.l.b16 %v344
    %v413 = vunpack.c.h.b16 %v344
    %v414 = vunpack.c.l.b16 %v345
    %v415 = vunpack.c.h.b16 %v345
    %v416 = vunpack.c.l.b16 %v346
    %v417 = vunpack.c.h.b16 %v346
    %v418 = vunpack.c.l.b16 %v347
    %v419 = vunpack.c.h.b16 %v347
    %v420 = vunpack.c.l.b16 %v348
    %v421 = vunpack.c.h.b16 %v348
    %v422 = vunpack.c.l.b16 %v349
    %v423 = vunpack.c.h.b16 %v349
    %v424 = vunpack.c.l.b16 %v350
    %v425 = vunpack.c.h.b16 %v350
    %v426 = vunpack.c.l.b16 %v351
    %v427 = vunpack.c.h.b16 %v351
    %v428 = vunpack.c.l.b16 %v352
    %v429 = vunpack.c.h.b16 %v352
    %v430 = vunpack.c.l.b16 %v353
    %v431 = vunpack.c.h.b16 %v353
    %v432 = vunpack.c.l.b16 %v354
    %v433 = vunpack.c.h.b16 %v354
    %v434 = vunpack.c.l.b16 %v355
    %v435 = vunpack.c.h.b16 %v355
    %v436 = vunpack.c.l.b16 %v356
    %v437 = vunpack.c.h.b16 %v356
    %v438 = vpack.c.b16 %v390, %v384
    %v439 = vpack.c.b16 %v391, %v385
    %v440 = vpack.c.b16 %v392, %v386
    %v441 = vpack.c.b16 %v393, %v387
    %v442 = vpack.c.b16 %v394, %v388
    %v443 = vpack.c.b16 %v395, %v389
    %v444 = vpack.c.b16 %v402, %v396
    %v445 = vpack.c.b16 %v403, %v397
    %v446 = vpack.c.b16 %v404, %v398
    %v447 = vpack.c.b16 %v405, %v399
    %v448 = vpack.c.b16 %v406, %v400
    %v449 = vpack.c.b16 %v407, %v401
    %v450 = vpack.c.b16 %v414, %v408
    %v451 = vpack.c.b16 %v415, %v409
    %v452 = vpack.c.b16 %v416, %v410
    %v453 = vpack.c.b16 %v417, %v411
    %v454 = vpack.c.b16 %v418, %v412
    %v455 = vpack.c.b16 %v419, %v413
    %v456 = vpack.c.b16 %v426, %v420
    %v457 = vpack.c.b16 %v427, %v421
    %v458 = vpack.c.b16 %v428, %v422
    %v459 = vpack.c.b16 %v429, %v423
    %v460 = vpack.c.b16 %v430, %v424
    %v461 = vpack.c.b16 %v431, %v425
    %v462 = vpack.c.b16 %v432, %v432
    %v463 = vpack.c.b16 %v433, %v433
    %v464 = vpack.c.b16 %v434, %v434
    %v465 = vpack.c.b16 %v435, %v435
    %v466 = vpack.c.b16 %v436, %v436
    %v467 = vpack.c.b16 %v437, %v437
    %vm492 = vcmask 588800
    %v494 = vsel %vm492, %v329, 0
    %vm496 = vcmask 1043456
    %v498 = vsel %vm496, %v462, 0
    %v501 = vsel %vm496, %v463, 0
    %v504 = vsel %vm496, %v464, 0
    %v507 = vsel %vm496, %v465, 0
    %v510 = vsel %vm496, %v466, 0
    %v513 = vsel %vm496, %v467, 0
    %515 = vmatprep.subr.bf16.mxu0 %v439
    %516 = vmatpush1.bf16.msra.mxu0 %v438
    %517 = vmatprep.subr.bf16.mxu0 %v445
    %518 = vmatpush1.bf16.msra.mxu0 %v444
    %519 = vmatprep.subr.bf16.mxu0 %v451
    %520 = vmatpush1.bf16.msra.mxu0 %v450
    %521 = vmatprep.subr.bf16.mxu0 %v457
    %522 = vmatpush1.bf16.msra.mxu0 %v456
    %523 = vmatprep.subr.bf16.mxu0 %v501
    %524 = vmatpush1.bf16.msra.mxu0 %v498
    %525 = vmatprep.subr.bf16.mxu0 0
    %526 = vmatpush1.bf16.msra.mxu0 0
    %527 = vmatprep.subr.bf16.mxu0 0
    %528 = vmatpush1.bf16.msra.mxu0 0
    %529 = vmatprep.subr.bf16.mxu0 0
    %530 = vmatpush1.bf16.msra.mxu0 0
    %531 = vmatprep.subr.bf16.mxu0 0
    %532 = vmatpush1.bf16.msra.mxu0 0
    %533 = vmatprep.subr.bf16.mxu0 0
    %534 = vmatpush1.bf16.msra.mxu0 0
    %535 = vmatprep.subr.bf16.mxu0 0
    %536 = vmatpush1.bf16.msra.mxu0 0
    %537 = vmatprep.subr.bf16.mxu0 0
    %538 = vmatpush1.bf16.msra.mxu0 0
    %539 = vmatprep.subr.bf16.mxu0 0
    %540 = vmatpush1.bf16.msra.mxu0 0
    %541 = vmatprep.subr.bf16.mxu0 0
    %542 = vmatpush1.bf16.msra.mxu0 0
    %543 = vmatprep.subr.bf16.mxu0 0
    %544 = vmatpush1.bf16.msra.mxu0 0
    %545 = vmatprep.subr.bf16.mxu0 0
    %546 = vmatpush1.bf16.msra.mxu0 0
    %547 = vmatprep.mubr.bf16.mxu0 0
    %548 = vmatmul.mubr.bf16.gmra.mrb[0].mxu0 %v494
    %v549 = vpop.f32.mrb[0].mxu0
    %v550 = vadd.f32 0.0, %v549
    %v551 = vpop.f32.mrb[0].mxu0
    %v552 = vadd.f32 0.0, %v551
    %v553 = vpop.f32.mrb[0].mxu0
    %v554 = vpop.f32.mrb[0].mxu0
    %555 = vdwg.mxu0
    %556 = vmatprep.subr.bf16.mxu0 %v441
    %557 = vmatpush1.bf16.msra.mxu0 %v440
    %558 = vmatprep.subr.bf16.mxu0 %v447
    %559 = vmatpush1.bf16.msra.mxu0 %v446
    %560 = vmatprep.subr.bf16.mxu0 %v453
    %561 = vmatpush1.bf16.msra.mxu0 %v452
    %562 = vmatprep.subr.bf16.mxu0 %v459
    %563 = vmatpush1.bf16.msra.mxu0 %v458
    %564 = vmatprep.subr.bf16.mxu0 %v507
    %565 = vmatpush1.bf16.msra.mxu0 %v504
    %566 = vmatprep.subr.bf16.mxu0 0
    %567 = vmatpush1.bf16.msra.mxu0 0
    %568 = vmatprep.subr.bf16.mxu0 0
    %569 = vmatpush1.bf16.msra.mxu0 0
    %570 = vmatprep.subr.bf16.mxu0 0
    %571 = vmatpush1.bf16.msra.mxu0 0
    %572 = vmatprep.subr.bf16.mxu0 0
    %573 = vmatpush1.bf16.msra.mxu0 0
    %574 = vmatprep.subr.bf16.mxu0 0
    %575 = vmatpush1.bf16.msra.mxu0 0
    %576 = vmatprep.subr.bf16.mxu0 0
    %577 = vmatpush1.bf16.msra.mxu0 0
    %578 = vmatprep.subr.bf16.mxu0 0
    %579 = vmatpush1.bf16.msra.mxu0 0
    %580 = vmatprep.subr.bf16.mxu0 0
    %581 = vmatpush1.bf16.msra.mxu0 0
    %582 = vmatprep.subr.bf16.mxu0 0
    %583 = vmatpush1.bf16.msra.mxu0 0
    %584 = vmatprep.subr.bf16.mxu0 0
    %585 = vmatpush1.bf16.msra.mxu0 0
    %586 = vmatprep.subr.bf16.mxu0 0
    %587 = vmatpush1.bf16.msra.mxu0 0
    %588 = vmatprep.mubr.bf16.mxu0 0
    %589 = vmatmul.mubr.bf16.gmra.mrb[0].mxu0 %v494
    %v590 = vpop.f32.mrb[0].mxu0
    %v591 = vadd.f32 0.0, %v590
    %v592 = vpop.f32.mrb[0].mxu0
    %v593 = vadd.f32 0.0, %v592
    %v594 = vpop.f32.mrb[0].mxu0
    %v595 = vpop.f32.mrb[0].mxu0
    %596 = vdwg.mxu0
    %597 = vmatprep.subr.bf16.mxu0 %v443
    %598 = vmatpush1.bf16.msra.mxu0 %v442
    %599 = vmatprep.subr.bf16.mxu0 %v449
    %600 = vmatpush1.bf16.msra.mxu0 %v448
    %601 = vmatprep.subr.bf16.mxu0 %v455
    %602 = vmatpush1.bf16.msra.mxu0 %v454
    %603 = vmatprep.subr.bf16.mxu0 %v461
    %604 = vmatpush1.bf16.msra.mxu0 %v460
    %605 = vmatprep.subr.bf16.mxu0 %v513
    %606 = vmatpush1.bf16.msra.mxu0 %v510
    %607 = vmatprep.subr.bf16.mxu0 0
    %608 = vmatpush1.bf16.msra.mxu0 0
    %609 = vmatprep.subr.bf16.mxu0 0
    %610 = vmatpush1.bf16.msra.mxu0 0
    %611 = vmatprep.subr.bf16.mxu0 0
    %612 = vmatpush1.bf16.msra.mxu0 0
    %613 = vmatprep.subr.bf16.mxu0 0
    %614 = vmatpush1.bf16.msra.mxu0 0
    %615 = vmatprep.subr.bf16.mxu0 0
    %616 = vmatpush1.bf16.msra.mxu0 0
    %617 = vmatprep.subr.bf16.mxu0 0
    %618 = vmatpush1.bf16.msra.mxu0 0
    %619 = vmatprep.subr.bf16.mxu0 0
    %620 = vmatpush1.bf16.msra.mxu0 0
    %621 = vmatprep.subr.bf16.mxu0 0
    %622 = vmatpush1.bf16.msra.mxu0 0
    %623 = vmatprep.subr.bf16.mxu0 0
    %624 = vmatpush1.bf16.msra.mxu0 0
    %625 = vmatprep.subr.bf16.mxu0 0
    %626 = vmatpush1.bf16.msra.mxu0 0
    %627 = vmatprep.subr.bf16.mxu0 0
    %628 = vmatpush1.bf16.msra.mxu0 0
    %629 = vmatprep.mubr.bf16.mxu0 0
    %630 = vmatmul.mubr.bf16.gmra.mrb[0].mxu0 %v494
    %v631 = vpop.f32.mrb[0].mxu0
    %v632 = vadd.f32 0.0, %v631
    %v633 = vpop.f32.mrb[0].mxu0
    %v634 = vadd.f32 0.0, %v633
    %v635 = vpop.f32.mrb[0].mxu0
    %v636 = vpop.f32.mrb[0].mxu0
    %637 = vdwg.mxu0
    %v638 = vpack.c.bf16 %v550, %v550
    %v639 = vpack.c.bf16 %v552, %v552
    %v640 = vpack.c.bf16 %v591, %v591
    %v644 = vunpack.c.l.b16 %v638
    %v645 = vunpack.c.l.b16 %v639
    %v646 = vunpack.c.l.b16 %v640
    %v647 = vpack.c.b16 %v645, %v644
    %v648 = vpack.c.b16 %v646, %v646
    %651 = vst [vmem:[#allocation8] sm:$0xff] %v647
    %652 = vst [vmem:[#allocation8 + $0x8] sm:$0xf] %v648
    %v653 = vpack.c.bf16 %v593, %v593
    %v654 = vpack.c.bf16 %v632, %v632
    %v655 = vpack.c.bf16 %v634, %v634
    %v659 = vunpack.c.l.b16 %v653
    %v660 = vunpack.c.l.b16 %v654
    %v661 = vunpack.c.l.b16 %v655
    %v662 = vpack.c.b16 %v660, %v659
    %v663 = vpack.c.b16 %v661, %v661
    %s666 = scalar_lea.vmem [#allocation8], 12
    %667 = vst [vmem:[%s666] sm:$0xff] %v662
    %668 = vst [vmem:[%s666 + $0x8] sm:$0xf] %v663
    // Predicated region
    $region18: #{tpu_custom_call.1} parent=1 // pred_check
      _
    $region19: #{tpu_custom_call.1} parent=1 // pred_check_branch
      %670 = sbr.rel (0) target = $region21
    $region20: #{tpu_custom_call.1} parent=1 // pred_region
      %s672 = ssub.s32 384, 384
      %673 = vsyncadd [#allocation5], %s672
      %s674 = sshll.u32 [#allocation8], 4
      %s675 = int_to_ptr.vmem [resolvable:$true] %s674
      %680 = dma.vmem_to_hbm [thread:$0]  %s675, 384, %s2, [#allocation5], 192, 192, 12
    $region21: #{tpu_custom_call.1} parent=1 // pred_fallthru
      _
    // Predicated region
    $region22: #{tpu_custom_call.1} parent=1 // pred_check
      _
    $region23: #{tpu_custom_call.1} parent=1 // pred_check_branch
      %682 = sbr.rel (0) target = $region25
    $region24: #{tpu_custom_call.1} parent=1 // pred_region
      %683 = dma.done [#allocation5], 384
    $region25: #{tpu_custom_call.1} parent=1 // pred_fallthru
      _
    %684 = vsyncpa [#allocation4], 1
    %685 = vsyncpa [#allocation7], 1
    %686 = vsyncpa [#allocation5], 1

</llo_original>
